<compile_context>
chip_gen: v6e
topology: v6e:2x2x1
jax: 0.10.0
libtpu: 0.0.40
codegen_flags: <defaults>
</compile_context>

<pallas_src>
import jax
import jax.numpy as jnp
from jax.experimental import pallas as pl
from jax.experimental.pallas import tpu as pltpu


# ---------------------------------------------------------------------------
# Kernel: identity copy of one (tile_r, cols) tile.
# ---------------------------------------------------------------------------
def _copy_kernel(x_ref, o_ref):
    o_ref[...] = x_ref[...]


_MAX_COLS = 2048  # lane-dense last-dim cap (multiple of 128)


def _select_budgets():
    """(tile_bytes, vmem_limit_bytes) chosen per TPU generation.

    v5e/v6e have 128 MiB VMEM -> bigger tiles amortize the ~0.35 us/step
    pipeline overhead.  v7x has 64 MiB VMEM -> cap tiles so that
    4 x tile (double-buffered input + output) stays well inside the limit.
    """
    vmem_cap = None
    try:
        info = pltpu.get_tpu_info()
        vmem_cap = getattr(info, "vmem_capacity_bytes", None)
    except Exception:
        vmem_cap = None
    if vmem_cap is None:
        vmem_cap = 64 * 1024 * 1024  # conservative: assume v7x-sized VMEM
    if vmem_cap >= 100 * 1024 * 1024:
        # v5e / v6e (128 MiB physical VMEM): peak = 4 x 16 MiB = 64 MiB.
        return 16 * 1024 * 1024, 96 * 1024 * 1024
    # v7x (64 MiB per-TC VMEM) or unknown: peak = 4 x 8 MiB = 32 MiB.
    return 8 * 1024 * 1024, 48 * 1024 * 1024


def _lane_dense_shape(numel):
    """Largest cols <= _MAX_COLS that is a multiple of 128 and divides numel."""
    for cols in range(_MAX_COLS, 127, -128):
        if numel % cols == 0:
            return numel // cols, cols
    return None


def _pallas_copy_2d(x2d, total_bytes):
    """Tiled, pipelined identity copy of a lane-dense 2-D array through VMEM."""
    rows, cols = x2d.shape
    itemsize = jnp.dtype(x2d.dtype).itemsize
    tile_bytes, vmem_limit = _select_budgets()

    # dtype-native sublane multiple: 8 for 4-byte, 16 for bf16, 32 for int8/fp8.
    sublane = max(8, 32 // itemsize)

    max_tile_r = max(sublane, (tile_bytes // (cols * itemsize)) // sublane * sublane)
    if rows <= max_tile_r:
        tile_r = rows  # block == full dim, always legal
    else:
        # Prefer a tile_r that divides rows (no masked trailing tile); search
        # a bounded window downward in sublane steps, else keep max_tile_r.
        tile_r = max_tile_r
        lo = max(sublane, max_tile_r - 64 * sublane)
        for cand in range(max_tile_r, lo - 1, -sublane):
            if rows % cand == 0:
                tile_r = cand
                break

    grid = (pl.cdiv(rows, tile_r),)

    return pl.pallas_call(
        _copy_kernel,
        out_shape=jax.ShapeDtypeStruct((rows, cols), x2d.dtype),
        grid=grid,
        in_specs=[pl.BlockSpec((tile_r, cols), lambda i: (i, 0))],
        out_specs=pl.BlockSpec((tile_r, cols), lambda i: (i, 0)),
        compiler_params=pltpu.CompilerParams(
            # TODO(synk): on v7x, pltpu.CORE_PARALLEL could shard this axis
            # across both TensorCores; "parallel" is kept for portability.
            dimension_semantics=("parallel",),
            vmem_limit_bytes=vmem_limit,
        ),
        cost_estimate=pl.CostEstimate(
            flops=0, transcendentals=0, bytes_accessed=2 * total_bytes
        ),
    )(x2d)


def _pallas_identity_copy(x):
    """Materialize a fresh copy of `x` via a lane-dense, row-tiled Pallas kernel."""
    numel = x.size
    if numel == 0:
        return x  # nothing to copy

    itemsize = jnp.dtype(x.dtype).itemsize

    shape2d = _lane_dense_shape(numel)
    if shape2d is not None:
        rows, cols = shape2d
        y2d = _pallas_copy_2d(x.reshape(rows, cols), numel * itemsize)
        return y2d.reshape(x.shape)

    # Odd element count (numel % 128 != 0): pad the flattened array up to the
    # next multiple of 128 and reuse the tiled lane-dense path.  This never
    # stages the whole array in VMEM (robust on v7x) and keeps unmasked
    # full-width stores for the bulk of the data.
    flat = x.reshape(-1)
    padded_numel = ((numel + 127) // 128) * 128
    flat_padded = jnp.pad(flat, (0, padded_numel - numel))
    rows, cols = _lane_dense_shape(padded_numel)
    y2d = _pallas_copy_2d(flat_padded.reshape(rows, cols), padded_numel * itemsize)
    return y2d.reshape(-1)[:numel].reshape(x.shape)


# ---------------------------------------------------------------------------
# Module wrapper — mirrors the PyTorch `Unsequeeze` forward.
# ---------------------------------------------------------------------------
class UnsequeezePallas:
    """JAX/Pallas equivalent of the PyTorch `Unsequeeze` module.

    unsqueeze is pure metadata, so by default (materialize=False) the call is
    a free reshape with zero HBM traffic — the fastest possible implementation
    on every TPU generation.  Set materialize=True to force a fresh output
    buffer via the tuned Pallas identity-copy kernel (note: the default /
    passthrough branches alias the input, the materialized branch does not).
    """

    def __init__(self, data, materialize=False):
        keys = list(data.keys())
        self.dim = data["dim"]
        self.max_dim = data["max_dim"] if "max_dim" in keys else 1000
        self.materialize = materialize

    def _norm_dim(self, x):
        # torch.unsqueeze accepts dims in [-(rank+1), rank]
        d = self.dim
        if d < 0:
            d = d + x.ndim + 1
        return d

    def __call__(self, x):
        # `if type(x) == List` in the PyTorch source never fires at runtime
        # (List is typing.List), so a bare array is the only supported input.
        if len(x.shape) >= self.max_dim:
            # Passthrough branch: return x unchanged — zero cost, no copy.
            return x

        d = self._norm_dim(x)
        out_shape = x.shape[:d] + (1,) + x.shape[d:]

        if not self.materialize:
            return x.reshape(out_shape)  # pure metadata, free

        y = _pallas_identity_copy(x)
        return y.reshape(out_shape)


if __name__ == "__main__":
    key = jax.random.PRNGKey(0)
    x = jax.random.normal(key, (2, 4, 16, 16), dtype=jnp.float32)  # NCHW

    # Default (fastest) path: pure metadata reshape, no copy.
    module = UnsequeezePallas({"dim": 1})  # max_dim defaults to 1000
    y = jax.block_until_ready(module(x))
    ref = jnp.expand_dims(x, axis=1)
    assert y.shape == ref.shape == (2, 1, 4, 16, 16), (y.shape, ref.shape)
    assert y.dtype == x.dtype
    assert bool(jnp.array_equal(y, ref))

    # Materialized path: exercises the lane-dense tiled Pallas copy kernel.
    module_mat = UnsequeezePallas({"dim": 1}, materialize=True)
    y_mat = jax.block_until_ready(module_mat(x))
    assert y_mat.shape == ref.shape
    assert bool(jnp.array_equal(y_mat, ref))

    # Negative dim (materialized).
    module_neg = UnsequeezePallas({"dim": -1}, materialize=True)
    y_neg = jax.block_until_ready(module_neg(x))
    assert bool(jnp.array_equal(y_neg, jnp.expand_dims(x, axis=-1)))

    # bf16 input exercises the dtype-native sublane rounding.
    x_bf16 = x.astype(jnp.bfloat16)
    y_bf16 = jax.block_until_ready(module_mat(x_bf16))
    assert bool(jnp.array_equal(y_bf16, jnp.expand_dims(x_bf16, axis=1)))

    # Passthrough branch (rank >= max_dim): no copy, returns x unchanged.
    module2 = UnsequeezePallas({"dim": 0, "max_dim": 4})
    y2 = jax.block_until_ready(module2(x))
    assert y2.shape == x.shape
    assert bool(jnp.array_equal(y2, x))

    # Odd-sized input (numel % 128 != 0) exercises the pad-to-128 fallback,
    # which still goes through the tiled lane-dense path (no VMEM OOM risk).
    x_odd = jax.random.normal(key, (3, 5, 7), dtype=jnp.float32)
    module3 = UnsequeezePallas({"dim": 0}, materialize=True)
    y3 = jax.block_until_ready(module3(x_odd))
    assert bool(jnp.array_equal(y3, jnp.expand_dims(x_odd, axis=0)))

    print("KERNEL_OK")
</pallas_src>

<mosaic_0001>
module attributes {stable_mosaic.version = 11 : i64} {
  func.func @_copy_kernel(%arg0: i32, %arg1: memref<1x2048xf32, #tpu.memory_space<vmem>>, %arg2: memref<1x2048xf32, #tpu.memory_space<vmem>>) attributes {dimension_semantics = [#tpu.dimension_semantics<parallel>], iteration_bounds = array<i64: 1>, scalar_prefetch = 0 : i64, scratch_operands = 0 : i64, tpu.core_type = #tpu.core_type<tc>, window_params = [{transform_indices = @transform_0, window_bounds = array<i64: 1, 2048>}, {transform_indices = @transform_1, window_bounds = array<i64: 1, 2048>}]} {
    %c0 = arith.constant 0 : index
    %c0_0 = arith.constant 0 : index
    %0 = vector.load %arg1[%c0, %c0_0] : memref<1x2048xf32, #tpu.memory_space<vmem>>, vector<1x2048xf32>
    %c0_1 = arith.constant 0 : index
    %c0_2 = arith.constant 0 : index
    %1 = vector.load %arg2[%c0_1, %c0_2] : memref<1x2048xf32, #tpu.memory_space<vmem>>, vector<1x2048xf32>
    tpu.vector_store %arg2[%c0_1, %c0_2], %0 {strides = array<i32>} : memref<1x2048xf32, #tpu.memory_space<vmem>>, vector<1x2048xf32>,
    return
  }
  func.func @transform_0(%arg0: i32) -> (i32, i32) {
    %c0_i32 = arith.constant 0 : i32
    %c0_i32_0 = arith.constant 0 : i32
    return %arg0, %c0_i32 : i32, i32
  }
  func.func @transform_1(%arg0: i32) -> (i32, i32) {
    %c0_i32 = arith.constant 0 : i32
    %c0_i32_0 = arith.constant 0 : i32
    return %arg0, %c0_i32 : i32, i32
  }
}

</mosaic_0001>

<llo_original>
// kernel: tpu_custom_call.1
$region0: #{tpu_custom_call.1}
  #allocation0 [shape = 'u32[]', space=smem, size = 0x4, offset = 0x4, fixed_abs, tag = 'smem constant byte address 0x4 - core index']
  #allocation1 [shape = 'u32[144,128]{1,0:T(1,128)}', space=vmem, size = 0x12000, scoped, tag = 'internal scratch']
  %s0 = inlined_call_operand.hbm [shape: f32[1,2048], index: 0, kind: input, shape index: {}]
  %s1 = inlined_call_operand.hbm [shape: f32[1,2048], index: 1, kind: output, shape index: {}]
  %s2 = sld [smem:[#allocation0]]
  $region18: #{tpu_custom_call.1} parent=0
    _
  %s4 = ssub.s32 1, %s2
  %s5 = scalar_select 0, %s4, %s2
  $region1: #{tpu_custom_call.1} parent=0
    #allocation2 [shape = 'u8[8192]{0}', space=vmem, size = 0x2000, scoped, tag = 'input window, operand 0, single buffered']
    #allocation3 [shape = 's32[1]{0}', space=sflag, size = 0x4, scoped, tag = 'scoped memory for tpu_custom_call.1']
    #allocation4 [shape = 's32[1]{0}', space=sflag, size = 0x4, scoped, tag = 'scoped memory for tpu_custom_call.1']
    #allocation5 [shape = 'u8[8192]{0}', space=vmem, size = 0x2000, scoped, tag = 'output window, operand 0, single buffered']
    %6 = vsyncpa [#allocation3], 0
    %7 = vsyncpa [#allocation4], 0
    // Predicated region
    $region2: #{tpu_custom_call.1} parent=1 // pred_check
      _
    $region3: #{tpu_custom_call.1} parent=1 // pred_check_branch
      %9 = sbr.rel (0) target = $region5
    $region4: #{tpu_custom_call.1} parent=1 // pred_region
      %s11 = ssub.s32 256, 256
      %12 = vsyncadd [#allocation3], %s11
      %s14 = sshll.u32 [#allocation2], 4
      %s15 = int_to_ptr.vmem [resolvable:$true] %s14
      %17 = dma.hbm_to_vmem [thread:$0]  %s0, 256, %s15, [#allocation3]
    $region5: #{tpu_custom_call.1} parent=1 // pred_fallthru
      _
    // Predicated region
    $region6: #{tpu_custom_call.1} parent=1 // pred_check
      _
    $region7: #{tpu_custom_call.1} parent=1 // pred_check_branch
      %19 = sbr.rel (0) target = $region9
    $region8: #{tpu_custom_call.1} parent=1 // pred_region
      %20 = dma.done [#allocation3], 256
    $region9: #{tpu_custom_call.1} parent=1 // pred_fallthru
      _
    %v21 = vld [vmem:[#allocation2] sm:$0xff]
    %v22 = vld [vmem:[#allocation2 + $0x8] sm:$0xff]
    %23 = vst [vmem:[#allocation5] sm:$0xff] %v21
    %24 = vst [vmem:[#allocation5 + $0x8] sm:$0xff] %v22
    // Predicated region
    $region10: #{tpu_custom_call.1} parent=1 // pred_check
      _
    $region11: #{tpu_custom_call.1} parent=1 // pred_check_branch
      %26 = sbr.rel (0) target = $region13
    $region12: #{tpu_custom_call.1} parent=1 // pred_region
      %s28 = ssub.s32 256, 256
      %29 = vsyncadd [#allocation4], %s28
      %s31 = sshll.u32 [#allocation5], 4
      %s32 = int_to_ptr.vmem [resolvable:$true] %s31
      %34 = dma.vmem_to_hbm [thread:$0]  %s32, 256, %s1, [#allocation4]
    $region13: #{tpu_custom_call.1} parent=1 // pred_fallthru
      _
    // Predicated region
    $region14: #{tpu_custom_call.1} parent=1 // pred_check
      _
    $region15: #{tpu_custom_call.1} parent=1 // pred_check_branch
      %36 = sbr.rel (0) target = $region17
    $region16: #{tpu_custom_call.1} parent=1 // pred_region
      %37 = dma.done [#allocation4], 256
    $region17: #{tpu_custom_call.1} parent=1 // pred_fallthru
      _
    %38 = vsyncpa [#allocation3], 1
    %39 = vsyncpa [#allocation4], 1

</llo_original>
